<compile_context>
chip_gen: v5e
topology: v5e:2x2
jax: 0.10.0
libtpu: 0.0.40
codegen_flags: <defaults>
</compile_context>

<pallas_src>
import functools

import jax
import jax.numpy as jnp
from jax.experimental import pallas as pl
from jax.experimental.pallas import tpu as pltpu


# Tile caps.  Output tile tm*tn*4 bytes; 512 x 2048 f32 is 4 MiB, ~8.5 MiB
# total with double buffering of inputs + output, safely under the default
# scoped VMEM limit everywhere (16 MiB on v5e, 32 MiB on v6e/v7x).  Measured
# tiled mem-bound kernels hit ~85% of HBM roofline at 512-wide tiles; going
# to 1024 only buys ~1% and would need a raised vmem limit on v5e.
_TM_DEFAULT = 512    # multiple of 8   -> legal ragged sublane blocks
_TN_DEFAULT = 2048   # multiple of 128 -> legal ragged, unmasked-width lane stores


def _mf_kernel(yc_ref, xt_ref, o_ref):
    # yc_ref: (tm, r), xt_ref: (r, tn), o_ref: (tm, tn).  Single MXU matmul,
    # f32 accumulation, store straight to the (lane-dense) output tile.
    o_ref[...] = jnp.dot(
        yc_ref[...], xt_ref[...], preferred_element_type=jnp.float32
    ).astype(o_ref.dtype)


@functools.partial(jax.jit, static_argnames=("tm_max", "tn_max"))
def _mf_matmul(y, c, x, *, tm_max=_TM_DEFAULT, tn_max=_TN_DEFAULT):
    """Compute (y @ c) @ x.T with a tiled Pallas kernel (no pad/slice)."""
    m, r = y.shape
    n, _ = x.shape

    # Fold C into Y once (tiny flops) and pre-transpose X once so the kernel
    # RHS is (r, n) and lane-dense along n.
    yc = jnp.dot(y, c, preferred_element_type=jnp.float32)   # (m, r)
    xt = x.T                                                  # (r, n)

    # Tile sizes: as large as possible, capped at the full dims.  When a dim
    # exceeds its cap, the cap is an (8,128)-multiple so the ragged final
    # block is legal; Pallas masks the out-of-bounds writeback and OOB input
    # rows/cols only feed OOB output elements, so no padding is needed.
    tm = m if m <= tm_max else tm_max
    tn = n if n <= tn_max else tn_max

    grid = (pl.cdiv(m, tm), pl.cdiv(n, tn))

    return pl.pallas_call(
        _mf_kernel,
        out_shape=jax.ShapeDtypeStruct((m, n), jnp.float32),
        grid_spec=pltpu.PrefetchScalarGridSpec(
            num_scalar_prefetch=0,
            grid=grid,
            in_specs=[
                pl.BlockSpec((tm, r), lambda i, j: (i, 0)),   # YC row tile
                pl.BlockSpec((r, tn), lambda i, j: (0, j)),   # X^T col tile
            ],
            out_specs=pl.BlockSpec((tm, tn), lambda i, j: (i, j)),
        ),
        compiler_params=pltpu.CompilerParams(
            dimension_semantics=("parallel", "parallel"),
        ),
        cost_estimate=pl.CostEstimate(
            flops=2 * m * n * r,
            transcendentals=0,
            bytes_accessed=4 * (m * n + m * r + n * r),
        ),
    )(yc, xt)


class MatrixFactorization:
    """JAX/Pallas port of the PyTorch MatrixFactorization module (forward only)."""

    def __init__(self, m, n, r=20, alphaX=-1e-09, alphaY=-1e-09,
                 max_C=100, lam_C=0, key=None):
        if key is None:
            key = jax.random.PRNGKey(0)
        kx, ky = jax.random.split(key)
        # torch.nn.init.uniform_ -> U(0, 1); eye_ -> identity.
        self.X = jax.random.uniform(kx, (n, r), dtype=jnp.float32)   # (n, r)
        self.Y = jax.random.uniform(ky, (m, r), dtype=jnp.float32)   # (m, r)
        self.C = jnp.eye(r, dtype=jnp.float32)                       # (r, r)
        self.lambdasX = jnp.zeros_like(self.X)
        self.lambdasY = jnp.zeros_like(self.Y)
        self.alphaX = alphaX
        self.alphaY = alphaY
        self.max_C = max_C
        self.lam_C = lam_C
        self.m, self.n, self.r = m, n, r

    def forward(self, J=None, I=None):
        # Row gather stays in JAX (cheap glue over O(|J|*r) bytes); the matmul
        # hot path is the Pallas kernel.
        # TODO(synk): for very large |J|/|I|, a scalar-prefetch row-gather
        # index_map (pl.Element) would avoid materializing the gathered copy
        # in HBM before the kernel reads it.
        if J is None and I is None:
            return _mf_matmul(self.Y, self.C, self.X)
        elif J is not None:
            return _mf_matmul(self.Y[J, :], self.C, self.X)
        else:
            return _mf_matmul(self.Y, self.C, self.X[I, :])

    # TODO(synk): phi / L_X / L_Y / L_C / prox_* are scalar training-loop
    # utilities with no hot-path compute worth a kernel; omitted from the
    # Pallas port.


if __name__ == "__main__":
    m, n, r = 48, 40, 20
    mf = MatrixFactorization(m, n, r, key=jax.random.PRNGKey(0))

    # Full forward: Y @ C @ X^T
    out_full = jax.block_until_ready(mf.forward(None, None))
    ref_full = mf.Y @ mf.C @ mf.X.T
    assert out_full.shape == (m, n)
    assert jnp.allclose(out_full, ref_full, atol=1e-5, rtol=1e-5)

    # Row-subset forward: Y[J] @ C @ X^T
    J = jnp.array([0, 3, 7, 11, 13, 21, 30, 47], dtype=jnp.int32)
    out_J = jax.block_until_ready(mf.forward(J, None))
    ref_J = mf.Y[J, :] @ mf.C @ mf.X.T
    assert out_J.shape == (J.shape[0], n)
    assert jnp.allclose(out_J, ref_J, atol=1e-5, rtol=1e-5)

    # Column-subset forward: Y @ C @ X[I]^T
    I = jnp.array([1, 2, 5, 8, 13, 34], dtype=jnp.int32)
    out_I = jax.block_until_ready(mf.forward(None, I))
    ref_I = mf.Y @ mf.C @ mf.X[I, :].T
    assert out_I.shape == (m, I.shape[0])
    assert jnp.allclose(out_I, ref_I, atol=1e-5, rtol=1e-5)

    # Larger shape exercising the multi-block grid with a ragged final
    # row-tile (1040 = 2*512 + 16), no padding / slicing involved.
    mf2 = MatrixFactorization(1040, 520, r, key=jax.random.PRNGKey(1))
    out2 = jax.block_until_ready(mf2.forward(None, None))
    ref2 = mf2.Y @ mf2.C @ mf2.X.T
    assert out2.shape == (1040, 520)
    assert jnp.allclose(out2, ref2, atol=1e-4, rtol=1e-4)

    print("KERNEL_OK")
</pallas_src>

<mosaic_0001>
module attributes {stable_mosaic.version = 11 : i64} {
  func.func @_mf_kernel(%arg0: i32, %arg1: i32, %arg2: memref<48x20xf32, #tpu.memory_space<vmem>>, %arg3: memref<20x40xf32, #tpu.memory_space<vmem>>, %arg4: memref<48x40xf32, #tpu.memory_space<vmem>>) attributes {dimension_semantics = [#tpu.dimension_semantics<parallel>, #tpu.dimension_semantics<parallel>], iteration_bounds = array<i64: 1, 1>, scalar_prefetch = 0 : i64, scratch_operands = 0 : i64, tpu.core_type = #tpu.core_type<tc>, window_params = [{transform_indices = @transform_0, window_bounds = array<i64: 48, 20>}, {transform_indices = @transform_1, window_bounds = array<i64: 20, 40>}, {transform_indices = @transform_2, window_bounds = array<i64: 48, 40>}]} {
    %c0 = arith.constant 0 : index
    %c0_0 = arith.constant 0 : index
    %0 = vector.load %arg2[%c0, %c0_0] : memref<48x20xf32, #tpu.memory_space<vmem>>, vector<48x20xf32>
    %c0_1 = arith.constant 0 : index
    %c0_2 = arith.constant 0 : index
    %1 = vector.load %arg3[%c0_1, %c0_2] : memref<20x40xf32, #tpu.memory_space<vmem>>, vector<20x40xf32>
    %cst = arith.constant dense<0.000000e+00> : vector<48x40xf32>
    %2 = tpu.matmul %0, %1, %cst {dimension_numbers = #tpu.dot_dimension_numbers<[1], [0], [0], [1], [0, 0, 1, 1], [], []>} : vector<48x20xf32>, vector<20x40xf32>, vector<48x40xf32> -> vector<48x40xf32>
    %c0_3 = arith.constant 0 : index
    %c0_4 = arith.constant 0 : index
    %3 = vector.load %arg4[%c0_3, %c0_4] : memref<48x40xf32, #tpu.memory_space<vmem>>, vector<48x40xf32>
    tpu.vector_store %arg4[%c0_3, %c0_4], %2 {strides = array<i32>} : memref<48x40xf32, #tpu.memory_space<vmem>>, vector<48x40xf32>,
    return
  }
  func.func @transform_0(%arg0: i32, %arg1: i32) -> (i32, i32) {
    %c0_i32 = arith.constant 0 : i32
    %c0_i32_0 = arith.constant 0 : i32
    return %arg0, %c0_i32 : i32, i32
  }
  func.func @transform_1(%arg0: i32, %arg1: i32) -> (i32, i32) {
    %c0_i32 = arith.constant 0 : i32
    %c0_i32_0 = arith.constant 0 : i32
    return %c0_i32, %arg1 : i32, i32
  }
  func.func @transform_2(%arg0: i32, %arg1: i32) -> (i32, i32) {
    %c0_i32 = arith.constant 0 : i32
    return %arg0, %arg1 : i32, i32
  }
}

</mosaic_0001>

<llo_original>
// kernel: _mf_matmul.1
$region0: #{_mf_matmul.1}
  #allocation0 [shape = 'u32[]', space=smem, size = 0x4, offset = 0x4, fixed_abs, tag = 'smem constant byte address 0x4 - core index']
  #allocation1 [shape = 'u32[72,128]{1,0:T(1,128)}', space=vmem, size = 0x9000, scoped, tag = 'internal scratch']
  %s0 = inlined_call_operand.vmem [shape: f32[48,20], index: 0, kind: input, shape index: {}]
  %s1 = inlined_call_operand.vmem [shape: f32[20,40], index: 1, kind: input, shape index: {}]
  %s2 = inlined_call_operand.vmem [shape: f32[48,40], index: 2, kind: output, shape index: {}]
  %s3 = sld [smem:[#allocation0]]
  $region18: #{_mf_matmul.1} parent=0
    _
  %s5 = ssub.s32 1, %s3
  %s6 = scalar_select 0, %s5, %s3
  // Predicated region
  $region2: #{_mf_matmul.1} parent=0 // pred_check
    _
  $region3: #{_mf_matmul.1} parent=0 // pred_check_branch
    %8 = sbr.rel (0) target = $region5
  $region4: #{_mf_matmul.1} parent=0 // pred_region
    _
  $region5: #{_mf_matmul.1} parent=0 // pred_fallthru
    _
  // Predicated region
  $region6: #{_mf_matmul.1} parent=0 // pred_check
    _
  $region7: #{_mf_matmul.1} parent=0 // pred_check_branch
    %10 = sbr.rel (0) target = $region9
  $region8: #{_mf_matmul.1} parent=0 // pred_region
    _
  $region9: #{_mf_matmul.1} parent=0 // pred_fallthru
    _
  %v11 = vld [vmem:[%s0] sm:$0xff]
  %v12 = vld [vmem:[%s0 + $0x8] sm:$0xff]
  %v13 = vld [vmem:[%s0 + $0x10] sm:$0xff]
  %v14 = vld [vmem:[%s0 + $0x18] sm:$0xff]
  %v15 = vld [vmem:[%s0 + $0x20] sm:$0xff]
  %v16 = vld [vmem:[%s0 + $0x28] sm:$0xff]
  %v17 = vld [vmem:[%s1] sm:$0xff]
  %v18 = vld [vmem:[%s1 + $0x8] sm:$0xff]
  %v19 = vld [vmem:[%s1 + $0x10] sm:$0xf]
  %vm20 = vcmask 162816
  %v22 = vsel %vm20, %v11, 0
  %v25 = vsel %vm20, %v12, 0
  %v28 = vsel %vm20, %v13, 0
  %v31 = vsel %vm20, %v14, 0
  %v34 = vsel %vm20, %v15, 0
  %v37 = vsel %vm20, %v16, 0
  %vm39 = vcmask 1043456
  %v41 = vsel %vm39, %v19, 0
  %43 = vmatpush.msra.mxu0 0.0
  %44 = vmatpush.msra.mxu0 0.0
  %45 = vmatpush.msra.mxu0 0.0
  %46 = vmatpush.msra.mxu0 0.0
  %47 = vmatpush.msra.mxu0 0.0
  %48 = vmatpush.msra.mxu0 0.0
  %49 = vmatpush.msra.mxu0 0.0
  %50 = vmatpush.msra.mxu0 0.0
  %51 = vmatpush.msra.mxu0 0.0
  %52 = vmatpush.msra.mxu0 0.0
  %53 = vmatpush.msra.mxu0 0.0
  %54 = vmatpush.msra.mxu0 0.0
  %55 = vmatpush.msra.mxu0 0.0
  %56 = vmatpush.msra.mxu0 %v41
  %57 = vmatpush.msra.mxu0 %v18
  %58 = vmatpush.msra.mxu0 %v17
  %59 = vmatmul.f32.gmra.mxu0 %v22
  %v60 = vpop.f32.mrf.mxu0
  %v61 = vadd.f32 0.0, %v60
  %62 = vmatmul.f32.gmra.mxu0 %v25
  %v63 = vpop.f32.mrf.mxu0
  %v64 = vadd.f32 0.0, %v63
  %65 = vmatmul.f32.gmra.mxu0 %v28
  %v66 = vpop.f32.mrf.mxu0
  %v67 = vadd.f32 0.0, %v66
  %68 = vmatmul.f32.gmra.mxu0 %v31
  %v69 = vpop.f32.mrf.mxu0
  %v70 = vadd.f32 0.0, %v69
  %71 = vmatmul.f32.gmra.mxu0 %v34
  %v72 = vpop.f32.mrf.mxu0
  %v73 = vadd.f32 0.0, %v72
  %74 = vmatmul.f32.gmra.mxu0 %v37
  %v75 = vpop.f32.mrf.mxu0
  %v76 = vadd.f32 0.0, %v75
  %77 = vdwg.mxu0
  %vm78 = vcmask 326656
  %79 = vst.msk [vmem:[%s2] sm:$0xff] %vm78, %v61
  %80 = vst.msk [vmem:[%s2 + $0x8] sm:$0xff] %vm78, %v64
  %81 = vst.msk [vmem:[%s2 + $0x10] sm:$0xff] %vm78, %v67
  %82 = vst.msk [vmem:[%s2 + $0x18] sm:$0xff] %vm78, %v70
  %83 = vst.msk [vmem:[%s2 + $0x20] sm:$0xff] %vm78, %v73
  %84 = vst.msk [vmem:[%s2 + $0x28] sm:$0xff] %vm78, %v76
  // Predicated region
  $region10: #{_mf_matmul.1} parent=0 // pred_check
    _
  $region11: #{_mf_matmul.1} parent=0 // pred_check_branch
    %86 = sbr.rel (0) target = $region13
  $region12: #{_mf_matmul.1} parent=0 // pred_region
    _
  $region13: #{_mf_matmul.1} parent=0 // pred_fallthru
    _
  // Predicated region
  $region14: #{_mf_matmul.1} parent=0 // pred_check
    _
  $region15: #{_mf_matmul.1} parent=0 // pred_check_branch
    %88 = sbr.rel (0) target = $region17
  $region16: #{_mf_matmul.1} parent=0 // pred_region
    _
  $region17: #{_mf_matmul.1} parent=0 // pred_fallthru
    _

</llo_original>
